<compile_context>
chip_gen: v7x
topology: tpu7x:2x2x1
jax: 0.10.0
libtpu: 0.0.40
codegen_flags: <defaults>
</compile_context>

<pallas_src>
import functools

import jax
import jax.numpy as jnp
from jax.experimental import pallas as pl
from jax.experimental.pallas import tpu as pltpu

_LANES = 128
_ACC_ROWS = 64          # (64,128) f32 accumulator == 8 vregs


def _wasserstein_small_kernel(score_ref, label_ref, out_ref):
    s = score_ref[...].astype(jnp.float32)
    l = label_ref[...].astype(jnp.float32)
    # -l*s + (1-l)*s == s * (1 - 2*l); padded score rows are zero -> contribute 0
    out_ref[0, 0] = jnp.sum(s * (1.0 - 2.0 * l))


def _wasserstein_tiled_kernel(score_ref, label_ref, out_ref, acc_ref, *,
                              tile_rows, steps_per_core, m_rows):
    c = pl.program_id(0)   # partial-sum / core index ("parallel")
    j = pl.program_id(1)   # streaming step ("arbitrary" reduction axis)

    @pl.when(j == 0)
    def _():
        acc_ref[...] = jnp.zeros_like(acc_ref)

    logical_block = c * steps_per_core + j
    block_row0 = logical_block * tile_rows
    n_chunks = tile_rows // _ACC_ROWS

    def accumulate(masked):
        # Unrolled 64-row chunks: loads + pure-VPU math into a register-resident
        # (64,128) partial; the VMEM accumulator is touched once per grid step.
        red = jnp.zeros((_ACC_ROWS, _LANES), jnp.float32)
        for t in range(n_chunks):
            r0 = t * _ACC_ROWS
            s = score_ref[r0:r0 + _ACC_ROWS, :].astype(jnp.float32)
            l = label_ref[r0:r0 + _ACC_ROWS, :].astype(jnp.float32)
            p = s * (1.0 - 2.0 * l)
            if masked:
                # Cold path only: ragged last block / clamped duplicate block.
                rows = (jax.lax.broadcasted_iota(jnp.int32,
                                                 (_ACC_ROWS, _LANES), 0)
                        + (block_row0 + r0))
                p = jnp.where(rows < m_rows, p, 0.0)
            red = red + p
        acc_ref[...] += red

    interior = block_row0 + tile_rows <= m_rows   # fully in-range block

    @pl.when(interior)
    def _():
        accumulate(masked=False)

    @pl.when(jnp.logical_not(interior))
    def _():
        accumulate(masked=True)

    @pl.when(j == pl.num_programs(1) - 1)
    def _():
        # single deferred cross-lane/sublane reduce per partial
        out_ref[0, 0] = jnp.sum(acc_ref[...])


def wasserstein_loss(score, label, *, tile_rows=None):
    assert score.shape == label.shape, "score/label must have matching shapes"
    n_elems = score.size

    if tile_rows is None:
        # keep tile bytes ~1 MiB per input per pipeline buffer
        itemsize = max(jnp.dtype(score.dtype).itemsize,
                       jnp.dtype(label.dtype).itemsize)
        tile_rows = 4096 if itemsize <= 2 else 2048
    assert tile_rows % _ACC_ROWS == 0

    # Keep the input dtypes for the HBM->VMEM stream; upcast inside the kernel.
    s = score.reshape(-1)
    l = label.reshape(-1)

    # Lane-align the flat length.  When numel % 128 == 0 (common case) the
    # reshape below is a free metadata change.  Otherwise jnp.pad materializes
    # a copy of both tensors; padded score=0 kills the padded contribution and
    # the mean divides by the ORIGINAL n_elems.
    # TODO(synk): for non-lane-aligned numel, a zero-copy 1-D flat-block path
    # with in-kernel element masking would remove this extra HBM pass.
    rem = n_elems % _LANES
    if rem:
        pad = _LANES - rem
        s = jnp.pad(s, (0, pad))
        l = jnp.pad(l, (0, pad))
    m = s.size // _LANES
    s2 = s.reshape(m, _LANES)
    l2 = l.reshape(m, _LANES)

    bytes_accessed = int(s2.size * s2.dtype.itemsize
                         + l2.size * l2.dtype.itemsize + 8)
    cost = pl.CostEstimate(flops=4 * n_elems, transcendentals=0,
                           bytes_accessed=bytes_accessed)

    if m <= 512:
        # Tiny problem: whole thing in one block; skip accumulator/grid logic.
        out = pl.pallas_call(
            _wasserstein_small_kernel,
            out_shape=jax.ShapeDtypeStruct((1, 1), jnp.float32),
            grid_spec=pltpu.PrefetchScalarGridSpec(
                num_scalar_prefetch=0,
                grid=(1,),
                in_specs=[
                    pl.BlockSpec((m, _LANES), lambda i: (0, 0)),
                    pl.BlockSpec((m, _LANES), lambda i: (0, 0)),
                ],
                out_specs=pl.BlockSpec((1, 1), lambda i: (0, 0),
                                       memory_space=pltpu.SMEM),
            ),
            cost_estimate=cost,
        )(s2, l2)
        return out[0, 0] / n_elems

    # Shrink the tile for mid-sized inputs so each partial still gets several
    # pipelined steps (DMA overlaps compute); large inputs use the full tile.
    tile_rows = int(min(tile_rows, max(256, 256 * (m // 1024))))

    num_blocks = pl.cdiv(m, tile_rows)
    steps_per_core = pl.cdiv(num_blocks, 2)

    def in_map(c, j):
        # Clamp so no block start lies fully outside the array; the duplicated /
        # ragged data is zeroed by the in-kernel row mask (cold branch only).
        return (jnp.minimum(c * steps_per_core + j, num_blocks - 1), 0)

    kernel = functools.partial(
        _wasserstein_tiled_kernel,
        tile_rows=tile_rows,
        steps_per_core=steps_per_core,
        m_rows=m,
    )

    partials = pl.pallas_call(
        kernel,
        out_shape=jax.ShapeDtypeStruct((2, 1), jnp.float32),
        grid_spec=pltpu.PrefetchScalarGridSpec(
            num_scalar_prefetch=0,
            grid=(2, steps_per_core),
            in_specs=[
                pl.BlockSpec((tile_rows, _LANES), in_map),
                pl.BlockSpec((tile_rows, _LANES), in_map),
            ],
            out_specs=pl.BlockSpec((1, 1), lambda c, j: (c, 0),
                                   memory_space=pltpu.SMEM),
            scratch_shapes=[pltpu.VMEM((_ACC_ROWS, _LANES), jnp.float32)],
        ),
        compiler_params=pltpu.CompilerParams(
            dimension_semantics=("parallel", "arbitrary"),
        ),
        cost_estimate=cost,
    )(s2, l2)
    return (partials[0, 0] + partials[1, 0]) / n_elems


def wasserstein_ref(score, label):
    s = score.astype(jnp.float32)
    lb = label.astype(jnp.float32)
    return jnp.mean(-lb * s + (1.0 - lb) * s)


if __name__ == "__main__":
    key = jax.random.PRNGKey(0)
    k1, k2, k3, k4, k5, k6 = jax.random.split(key, 6)

    # primary small case consistent with a discriminator score / label pair
    score = jax.random.normal(k1, (2, 4, 16, 16), dtype=jnp.float32)
    label = (jax.random.uniform(k2, (2, 4, 16, 16)) > 0.5).astype(jnp.float32)
    out = jax.block_until_ready(wasserstein_loss(score, label))
    ref = wasserstein_ref(score, label)
    assert jnp.allclose(out, ref, atol=1e-5, rtol=1e-5), (out, ref)

    # tiled path: lane-aligned size, ragged last tile + clamped/masked block
    score_l = jax.random.normal(k3, (3, 2, 160, 160), dtype=jnp.float32)
    label_l = (jax.random.uniform(k4, (3, 2, 160, 160)) > 0.5).astype(jnp.float32)
    out_l = jax.block_until_ready(wasserstein_loss(score_l, label_l))
    ref_l = wasserstein_ref(score_l, label_l)
    assert jnp.allclose(out_l, ref_l, atol=1e-5, rtol=1e-5), (out_l, ref_l)

    # tiled path with a non-lane-aligned element count (tail pad fallback)
    score_r = jax.random.normal(k5, (3, 7, 100, 100), dtype=jnp.float32)
    label_r = (jax.random.uniform(k6, (3, 7, 100, 100)) > 0.5).astype(jnp.float32)
    out_r = jax.block_until_ready(wasserstein_loss(score_r, label_r))
    ref_r = wasserstein_ref(score_r, label_r)
    assert jnp.allclose(out_r, ref_r, atol=1e-5, rtol=1e-5), (out_r, ref_r)

    print("KERNEL_OK")
</pallas_src>

<mosaic_0001>
module attributes {stable_mosaic.version = 11 : i64} {
  func.func @_wasserstein_small_kernel(%arg0: i32, %arg1: memref<16x128xf32, #tpu.memory_space<vmem>>, %arg2: memref<16x128xf32, #tpu.memory_space<vmem>>, %arg3: memref<1x1xf32, #tpu.memory_space<smem>>) attributes {dimension_semantics = [#tpu.dimension_semantics<arbitrary>], iteration_bounds = array<i64: 1>, scalar_prefetch = 0 : i64, scratch_operands = 0 : i64, tpu.core_type = #tpu.core_type<tc>, window_params = [{pipeline_mode = #tpu.pipeline_mode<synchronous>, transform_indices = @transform_0, window_bounds = array<i64: 16, 128>}, {pipeline_mode = #tpu.pipeline_mode<synchronous>, transform_indices = @transform_1, window_bounds = array<i64: 16, 128>}, {transform_indices = @transform_2, window_bounds = array<i64: 1, 1>}]} {
    %c0 = arith.constant 0 : index
    %c0_0 = arith.constant 0 : index
    %0 = vector.load %arg1[%c0, %c0_0] : memref<16x128xf32, #tpu.memory_space<vmem>>, vector<16x128xf32>
    %c0_1 = arith.constant 0 : index
    %c0_2 = arith.constant 0 : index
    %1 = vector.load %arg2[%c0_1, %c0_2] : memref<16x128xf32, #tpu.memory_space<vmem>>, vector<16x128xf32>
    %cst = arith.constant 2.000000e+00 : f32
    %2 = vector.broadcast %cst : f32 to vector<16x128xf32>
    %3 = arith.mulf %2, %1 : vector<16x128xf32>
    %cst_3 = arith.constant 1.000000e+00 : f32
    %4 = vector.broadcast %cst_3 : f32 to vector<16x128xf32>
    %5 = arith.subf %4, %3 : vector<16x128xf32>
    %6 = arith.mulf %0, %5 : vector<16x128xf32>
    %7 = vector.shape_cast %6 : vector<16x128xf32> to vector<1x16x128xf32>
    %cst_4 = arith.constant dense<0.000000e+00> : vector<1xf32>
    %8 = vector.multi_reduction <add>, %7, %cst_4 [1, 2] : vector<1x16x128xf32> to vector<1xf32>
    %9 = vector.shape_cast %8 : vector<1xf32> to vector<1x1x1xf32>
    %10 = vector.extract %9[0, 0, 0] : f32 from vector<1x1x1xf32>
    %c0_5 = arith.constant 0 : index
    %c0_6 = arith.constant 0 : index
    %11 = memref.load %arg3[%c0_5, %c0_6] : memref<1x1xf32, #tpu.memory_space<smem>>
    memref.store %10, %arg3[%c0_5, %c0_6] : memref<1x1xf32, #tpu.memory_space<smem>>
    return
  }
  func.func @transform_0(%arg0: i32) -> (i32, i32) {
    %c0_i32 = arith.constant 0 : i32
    %c0_i32_0 = arith.constant 0 : i32
    %c0_i32_1 = arith.constant 0 : i32
    return %c0_i32, %c0_i32_0 : i32, i32
  }
  func.func @transform_1(%arg0: i32) -> (i32, i32) {
    %c0_i32 = arith.constant 0 : i32
    %c0_i32_0 = arith.constant 0 : i32
    %c0_i32_1 = arith.constant 0 : i32
    return %c0_i32, %c0_i32_0 : i32, i32
  }
  func.func @transform_2(%arg0: i32) -> (i32, i32) {
    %c0_i32 = arith.constant 0 : i32
    %c0_i32_0 = arith.constant 0 : i32
    %c0_i32_1 = arith.constant 0 : i32
    return %c0_i32, %c0_i32_0 : i32, i32
  }
}

</mosaic_0001>

<llo_original>
// kernel: tpu_custom_call.1
$region0: #{tpu_custom_call.1}
  #allocation0 [shape = 'u32[]', space=smem, size = 0x4, offset = 0x4, fixed_abs, tag = 'smem constant byte address 0x4 - core index']
  #allocation1 [shape = 'u32[144,128]{1,0:T(1,128)}', space=vmem, size = 0x12000, scoped, tag = 'internal scratch']
  %s0 = inlined_call_operand.hbm [shape: f32[16,128], index: 0, kind: input, shape index: {}]
  %s1 = inlined_call_operand.hbm [shape: f32[16,128], index: 1, kind: input, shape index: {}]
  %s2 = inlined_call_operand.hbm [shape: f32[1,1], index: 2, kind: output, shape index: {}]
  %s3 = sld [smem:[#allocation0]]
  $region26: #{tpu_custom_call.1} parent=0
    _
  %s5 = ssub.s32 1, %s3
  %s6 = scalar_select 0, %s5, %s3
  $region1: #{tpu_custom_call.1} parent=0
    #allocation2 [shape = 'u8[8192]{0}', space=vmem, size = 0x2000, scoped, tag = 'input window, operand 0, single buffered']
    #allocation3 [shape = 's32[1]{0}', space=sflag, size = 0x4, scoped, tag = 'scoped memory for tpu_custom_call.1']
    #allocation4 [shape = 's32[1]{0}', space=sflag, size = 0x4, scoped, tag = 'scoped memory for tpu_custom_call.1']
    #allocation5 [shape = 'u8[8192]{0}', space=vmem, size = 0x2000, scoped, tag = 'input window, operand 1, single buffered']
    #allocation6 [shape = 's32[1]{0}', space=sflag, size = 0x4, scoped, tag = 'scoped memory for tpu_custom_call.1']
    #allocation7 [shape = 'u8[512]{0}', space=smem, size = 0x200, scoped, tag = 'output window, operand 0, single buffered']
    %7 = vsyncpa [#allocation3], 0
    %8 = vsyncpa [#allocation6], 0
    %9 = vsyncpa [#allocation4], 0
    // Predicated region
    $region2: #{tpu_custom_call.1} parent=1 // pred_check
      _
    $region3: #{tpu_custom_call.1} parent=1 // pred_check_branch
      %11 = sbr.rel (0) target = $region5
    $region4: #{tpu_custom_call.1} parent=1 // pred_region
      %s13 = ssub.s32 256, 256
      %14 = vsyncadd [#allocation3], %s13
      %s15 = sshll.u32 [#allocation2], 4
      %s16 = int_to_ptr.vmem [resolvable:$true] %s15
      %21 = dma.hbm_to_vmem [thread:$0]  %s0, 256, %s16, [#allocation3], 128, 128, 8
    $region5: #{tpu_custom_call.1} parent=1 // pred_fallthru
      _
    // Predicated region
    $region6: #{tpu_custom_call.1} parent=1 // pred_check
      _
    $region7: #{tpu_custom_call.1} parent=1 // pred_check_branch
      %23 = sbr.rel (0) target = $region9
    $region8: #{tpu_custom_call.1} parent=1 // pred_region
      %s25 = ssub.s32 256, 256
      %26 = vsyncadd [#allocation6], %s25
      %s27 = sshll.u32 [#allocation5], 4
      %s28 = int_to_ptr.vmem [resolvable:$true] %s27
      %33 = dma.hbm_to_vmem [thread:$0]  %s1, 256, %s28, [#allocation6], 128, 128, 8
    $region9: #{tpu_custom_call.1} parent=1 // pred_fallthru
      _
    // Predicated region
    $region10: #{tpu_custom_call.1} parent=1 // pred_check
      _
    $region11: #{tpu_custom_call.1} parent=1 // pred_check_branch
      %35 = sbr.rel (0) target = $region13
    $region12: #{tpu_custom_call.1} parent=1 // pred_region
      %36 = dma.done [#allocation3], 256
    $region13: #{tpu_custom_call.1} parent=1 // pred_fallthru
      _
    // Predicated region
    $region14: #{tpu_custom_call.1} parent=1 // pred_check
      _
    $region15: #{tpu_custom_call.1} parent=1 // pred_check_branch
      %38 = sbr.rel (0) target = $region17
    $region16: #{tpu_custom_call.1} parent=1 // pred_region
      %39 = dma.done [#allocation6], 256
    $region17: #{tpu_custom_call.1} parent=1 // pred_fallthru
      _
    %v40 = vld [vmem:[#allocation2] sm:$0xff]
    %v41 = vld [vmem:[#allocation2 + $0x8] sm:$0xff]
    %v42 = vld [vmem:[#allocation5] sm:$0xff]
    %v43 = vld [vmem:[#allocation5 + $0x8] sm:$0xff]
    %v44 = vmul.f32 %v42, 2.0
    %v45 = vmul.f32 %v43, 2.0
    %v46 = vsub.f32 1.0, %v44
    %v47 = vsub.f32 1.0, %v45
    %v48 = vmul.f32 %v40, %v46
    %v49 = vmul.f32 %v41, %v47
    %v50 = vadd.f32 %v48, %v49
    %51 = vadd.xlane.f32.xlu0 %v50
    %v52 = vpop.xlane.xlu0 %51
    %v53 = vrot.slane %v52, 4
    %v54 = vadd.f32 %v52, %v53
    %v55 = vrot.slane %v54, 2
    %v56 = vadd.f32 %v54, %v55
    %v57 = vrot.slane %v56, 1
    %v58 = vadd.f32 %v56, %v57
    %s59 = vtos %v58
    %s60 = scalar_lea.smem [#allocation7], 0
    %61 = sst [smem:[%s60]] %s59
    // Predicated region
    $region18: #{tpu_custom_call.1} parent=1 // pred_check
      _
    $region19: #{tpu_custom_call.1} parent=1 // pred_check_branch
      %63 = sbr.rel (0) target = $region21
    $region20: #{tpu_custom_call.1} parent=1 // pred_region
      %s65 = ssub.s32 16, 16
      %66 = vsyncadd [#allocation4], %s65
      %69 = dma.smem_to_hbm [#allocation7], 16, %s2, [#allocation4]
    $region21: #{tpu_custom_call.1} parent=1 // pred_fallthru
      _
    // Predicated region
    $region22: #{tpu_custom_call.1} parent=1 // pred_check
      _
    $region23: #{tpu_custom_call.1} parent=1 // pred_check_branch
      %71 = sbr.rel (0) target = $region25
    $region24: #{tpu_custom_call.1} parent=1 // pred_region
      %72 = dma.done [#allocation4], 16
    $region25: #{tpu_custom_call.1} parent=1 // pred_fallthru
      _
    %73 = sfence
    %74 = vsyncpa [#allocation3], 1
    %75 = vsyncpa [#allocation6], 1
    %76 = vsyncpa [#allocation4], 1

</llo_original>
